<compile_context>
chip_gen: v5e
topology: v5e:2x2
jax: 0.10.0
libtpu: 0.0.40
codegen_flags: <defaults>
</compile_context>

<pallas_src>
import functools

import jax
import jax.numpy as jnp
from jax.experimental import pallas as pl
from jax.experimental.pallas import tpu as pltpu

EPS = 1e-6
LANE = 128


def _round_up(x, m):
    return (x + m - 1) // m * m


def _gat_kernel(x_ref, g_ref, w_ref, o_ref, *, inv_f_in):
    """Fused RMS-LayerNorm -> Linear (gamma folded, no bias) -> residual add.

    Packed layout: each kernel row holds `pack` consecutive nodes, each node a
    contiguous segment of f_in lanes.
      x_ref: (block_rows, pack*f_in)    packed node features
      g_ref: (pack*f_in, pack*f_in)     block-diag of ones -> per-node sum(x^2)
      w_ref: (pack*f_in, pack*f_out)    block-diag of gamma-folded W^T
      o_ref: (block_rows, pack*f_out)   packed output
    """
    x = x_ref[...].astype(jnp.float32)
    # Per-node sum of squares on the (otherwise idle) MXU: every lane of a
    # node's segment ends up holding that node's sum(x^2).
    sq = jnp.dot(x * x, g_ref[...], preferred_element_type=jnp.float32)
    h = x * jax.lax.rsqrt(sq * inv_f_in + EPS)
    # gamma was folded into w on the host:  (g*h) @ W^T == h @ (g[:,None]*W^T).
    # TODO(synk): cast h / w to bf16 here (keeping f32 accumulation) once F
    # scales and the accuracy budget allows; kept f32 to match torch math.
    y = jnp.dot(h, w_ref[...], preferred_element_type=jnp.float32)
    # residual skip: out = x + linear(norm(x)), all per-row.
    o_ref[...] = (x + y).astype(o_ref.dtype)


def prepare_gat_params(w_proj, gamma, num_nodes):
    """Hoisted parameter prep (run once per parameter change, not per call).

    w_proj: (H*F_out, F_in)  linear_proj.weight (torch layout)
    gamma:  (F_in,)          layer_norm.weight
    Returns (g_bd, w_bd, pack, f_in).
    """
    f_in = gamma.shape[0]
    f_out_total = w_proj.shape[0]
    # The reference forward's view(-1, H, F) + residual implies F_in == H*F_out.
    assert f_out_total == f_in, "GATLayer forward requires num_in == H*num_out"

    # Pack as many whole nodes as fit in one 128-lane vreg row (free contiguous
    # reshape on the host side); fall back to pack=1 (full-extent 32-wide
    # blocks, still unpadded) when shapes don't allow it.
    if LANE % f_in == 0 and num_nodes % max(LANE // f_in, 1) == 0:
        pack = LANE // f_in
    else:
        pack = 1

    # Fold gamma into the transposed weight:  (g*h) @ W^T == h @ (g[:,None]*W^T)
    wt = jnp.transpose(w_proj).astype(jnp.float32) * gamma.astype(jnp.float32)[:, None]
    eye = jnp.eye(pack, dtype=jnp.float32)
    w_bd = jnp.kron(eye, wt)                                    # (pack*f_in, pack*f_out)
    g_bd = jnp.kron(eye, jnp.ones((f_in, f_in), jnp.float32))   # (pack*f_in, pack*f_in)
    return g_bd, w_bd, pack, f_in


def gat_layer_forward(x, edge_index, g_bd, w_bd, *, pack, f_in, block_nodes=2048):
    """Pallas implementation of GATLayer.forward (eval mode).

    x:          (N, F_in)  float32
    edge_index: (2, E)     int32   (returned unchanged, as in the module)
    g_bd, w_bd: outputs of prepare_gat_params
    """
    if edge_index.shape[1] == 0:          # same early-exit as the torch module
        return x, edge_index

    n = x.shape[0]
    width_in = g_bd.shape[0]
    width_out = w_bd.shape[1]
    f_out_total = width_out // pack
    packed_n = n // pack

    xp = x.reshape(packed_n, width_in)    # free contiguous reshape, no copy

    # Big row tile (amortizes ~0.35us/step pipeline overhead) but keep the
    # grid length >= 2 so both v7x TensorCores get work under ("parallel",).
    # No row padding: Pallas masks the partial trailing block (per-row math).
    block_rows = max(8, min(max(block_nodes // pack, 8),
                            _round_up(pl.cdiv(packed_n, 2), 8)))
    if block_rows > packed_n:
        block_rows = packed_n             # tiny graphs: single full-extent block
    grid = (pl.cdiv(packed_n, block_rows),)

    # Tight VMEM request: double-buffered x/out tiles + double-buffered (small)
    # weights + margin.  No artificial 32 MiB floor; capped well below v7x's
    # 64 MiB physical VMEM.
    vmem_bytes = 4 * (2 * block_rows * (width_in + width_out)
                      + 2 * width_in * (width_in + width_out)) + (4 << 20)
    vmem_bytes = min(vmem_bytes, 48 << 20)

    kernel = functools.partial(_gat_kernel, inv_f_in=1.0 / f_in)

    out_p = pl.pallas_call(
        kernel,
        out_shape=jax.ShapeDtypeStruct((packed_n, width_out), x.dtype),
        grid_spec=pltpu.PrefetchScalarGridSpec(
            num_scalar_prefetch=0,
            grid=grid,
            in_specs=[
                pl.BlockSpec((block_rows, width_in), lambda i: (i, 0)),
                # Constant index maps -> weights DMA'd once and stay resident.
                # TODO(synk): use pipeline_mode=pl.Buffered(1) for multi-MiB
                # weights (large F) to halve their VMEM footprint.
                pl.BlockSpec((width_in, width_in), lambda i: (0, 0)),
                pl.BlockSpec((width_in, width_out), lambda i: (0, 0)),
            ],
            out_specs=pl.BlockSpec((block_rows, width_out), lambda i: (i, 0)),
        ),
        compiler_params=pltpu.CompilerParams(
            dimension_semantics=("parallel",),
            vmem_limit_bytes=vmem_bytes,
        ),
    )(xp, g_bd, w_bd)

    out = out_p.reshape(n, f_out_total)   # free contiguous reshape back
    return out, edge_index


def _reference_forward(x, edge_index, w_proj, gamma):
    """Pure-JAX reference of the effective torch forward (eval mode)."""
    xf = x.astype(jnp.float32)
    variance = jnp.mean(xf * xf, axis=-1, keepdims=True)
    h = gamma.astype(jnp.float32) * (xf * jax.lax.rsqrt(variance + EPS))
    y = h @ w_proj.astype(jnp.float32).T
    return (xf + y).astype(x.dtype), edge_index


if __name__ == "__main__":
    # Hyper-params consistent with the forward's implicit constraint
    # (num_in_features == num_of_heads * num_out_features).
    num_in_features = 32
    num_of_heads = 4
    num_out_features = 8
    n_nodes = 1000          # non-multiple of the tile: exercises the masked tail
    n_edges = 200

    key = jax.random.PRNGKey(0)
    kx, kw, ks, kt, kg, ke = jax.random.split(key, 6)

    x = jax.random.normal(kx, (n_nodes, num_in_features), dtype=jnp.float32)

    # Deterministic parameter init mirroring GATLayer.init_params
    std = (num_in_features * num_of_heads * num_out_features) ** -0.5
    w_proj = std * jax.random.normal(
        kw, (num_of_heads * num_out_features, num_in_features), dtype=jnp.float32
    )
    # scoring_fn_source / scoring_fn_target / bias exist in the module but do
    # not influence the output (their branch is overwritten); created for
    # shape fidelity only.
    std_s = (num_of_heads * num_out_features) ** -0.5
    scoring_fn_source = std_s * jax.random.normal(
        ks, (1, num_of_heads, num_out_features), dtype=jnp.float32
    )
    scoring_fn_target = std_s * jax.random.normal(
        kt, (1, num_of_heads, num_out_features), dtype=jnp.float32
    )
    bias = jnp.zeros((num_of_heads * num_out_features,), dtype=jnp.float32)
    # Non-trivial layer_norm weight to actually exercise the gamma fold.
    gamma = 1.0 + 0.1 * jax.random.normal(kg, (num_in_features,), dtype=jnp.float32)

    edge_index = jax.random.randint(ke, (2, n_edges), 0, n_nodes, dtype=jnp.int32)

    # Hoisted weight prep (once per parameter update), jitted fused forward.
    g_bd, w_bd, pack, f_in = prepare_gat_params(w_proj, gamma, n_nodes)
    g_bd, w_bd = jax.block_until_ready((g_bd, w_bd))
    forward = jax.jit(functools.partial(gat_layer_forward, pack=pack, f_in=f_in))

    out, ei = forward(x, edge_index, g_bd, w_bd)
    out = jax.block_until_ready(out)

    ref, _ = _reference_forward(x, edge_index, w_proj, gamma)
    assert out.shape == (n_nodes, num_of_heads * num_out_features)
    assert jnp.allclose(out, ref, atol=1e-4, rtol=1e-4), "mismatch vs reference"

    print("KERNEL_OK")
</pallas_src>

<mosaic_0001>
module attributes {stable_mosaic.version = 11 : i64} {
  func.func @_gat_kernel(%arg0: i32, %arg1: memref<128x128xf32, #tpu.memory_space<vmem>>, %arg2: memref<128x128xf32, #tpu.memory_space<vmem>>, %arg3: memref<128x128xf32, #tpu.memory_space<vmem>>, %arg4: memref<128x128xf32, #tpu.memory_space<vmem>>) attributes {dimension_semantics = [#tpu.dimension_semantics<parallel>], iteration_bounds = array<i64: 2>, scalar_prefetch = 0 : i64, scratch_operands = 0 : i64, tpu.core_type = #tpu.core_type<tc>, window_params = [{transform_indices = @transform_0, window_bounds = array<i64: 128, 128>}, {pipeline_mode = #tpu.pipeline_mode<synchronous>, transform_indices = @transform_1, window_bounds = array<i64: 128, 128>}, {pipeline_mode = #tpu.pipeline_mode<synchronous>, transform_indices = @transform_2, window_bounds = array<i64: 128, 128>}, {transform_indices = @transform_3, window_bounds = array<i64: 128, 128>}]} {
    %c0 = arith.constant 0 : index
    %c0_0 = arith.constant 0 : index
    %0 = vector.load %arg1[%c0, %c0_0] : memref<128x128xf32, #tpu.memory_space<vmem>>, vector<128x128xf32>
    %1 = arith.mulf %0, %0 : vector<128x128xf32>
    %c0_1 = arith.constant 0 : index
    %c0_2 = arith.constant 0 : index
    %2 = vector.load %arg2[%c0_1, %c0_2] : memref<128x128xf32, #tpu.memory_space<vmem>>, vector<128x128xf32>
    %cst = arith.constant dense<0.000000e+00> : vector<128x128xf32>
    %3 = tpu.matmul %1, %2, %cst {dimension_numbers = #tpu.dot_dimension_numbers<[1], [0], [0], [1], [0, 0, 1, 1], [], []>} : vector<128x128xf32>, vector<128x128xf32>, vector<128x128xf32> -> vector<128x128xf32>
    %cst_3 = arith.constant 3.125000e-02 : f32
    %4 = vector.broadcast %cst_3 : f32 to vector<128x128xf32>
    %5 = arith.mulf %3, %4 : vector<128x128xf32>
    %cst_4 = arith.constant 9.99999997E-7 : f32
    %6 = vector.broadcast %cst_4 : f32 to vector<128x128xf32>
    %7 = arith.addf %5, %6 : vector<128x128xf32>
    %8 = math.rsqrt %7 : vector<128x128xf32>
    %9 = arith.mulf %0, %8 : vector<128x128xf32>
    %c0_5 = arith.constant 0 : index
    %c0_6 = arith.constant 0 : index
    %10 = vector.load %arg3[%c0_5, %c0_6] : memref<128x128xf32, #tpu.memory_space<vmem>>, vector<128x128xf32>
    %cst_7 = arith.constant dense<0.000000e+00> : vector<128x128xf32>
    %11 = tpu.matmul %9, %10, %cst_7 {dimension_numbers = #tpu.dot_dimension_numbers<[1], [0], [0], [1], [0, 0, 1, 1], [], []>} : vector<128x128xf32>, vector<128x128xf32>, vector<128x128xf32> -> vector<128x128xf32>
    %12 = arith.addf %0, %11 : vector<128x128xf32>
    %c0_8 = arith.constant 0 : index
    %c0_9 = arith.constant 0 : index
    %13 = vector.load %arg4[%c0_8, %c0_9] : memref<128x128xf32, #tpu.memory_space<vmem>>, vector<128x128xf32>
    tpu.vector_store %arg4[%c0_8, %c0_9], %12 {strides = array<i32>} : memref<128x128xf32, #tpu.memory_space<vmem>>, vector<128x128xf32>,
    return
  }
  func.func @transform_0(%arg0: i32) -> (i32, i32) {
    %c0_i32 = arith.constant 0 : i32
    %c0_i32_0 = arith.constant 0 : i32
    return %arg0, %c0_i32 : i32, i32
  }
  func.func @transform_1(%arg0: i32) -> (i32, i32) {
    %c0_i32 = arith.constant 0 : i32
    %c0_i32_0 = arith.constant 0 : i32
    %c0_i32_1 = arith.constant 0 : i32
    return %c0_i32, %c0_i32_0 : i32, i32
  }
  func.func @transform_2(%arg0: i32) -> (i32, i32) {
    %c0_i32 = arith.constant 0 : i32
    %c0_i32_0 = arith.constant 0 : i32
    %c0_i32_1 = arith.constant 0 : i32
    return %c0_i32, %c0_i32_0 : i32, i32
  }
  func.func @transform_3(%arg0: i32) -> (i32, i32) {
    %c0_i32 = arith.constant 0 : i32
    %c0_i32_0 = arith.constant 0 : i32
    return %arg0, %c0_i32 : i32, i32
  }
}

</mosaic_0001>

<llo_original>
// kernel: gat_layer_forward.1
$region0: #{gat_layer_forward.1}
  #allocation0 [shape = 'u32[]', space=smem, size = 0x4, offset = 0x4, fixed_abs, tag = 'smem constant byte address 0x4 - core index']
  #allocation1 [shape = 'u32[72,128]{1,0:T(1,128)}', space=vmem, size = 0x9000, scoped, tag = 'internal scratch']
  %s0 = inlined_call_operand.vmem [shape: f32[250,128], index: 0, kind: input, shape index: {}]
  %s1 = inlined_call_operand.vmem [shape: f32[128,128], index: 1, kind: input, shape index: {}]
  %s2 = inlined_call_operand.vmem [shape: f32[128,128], index: 2, kind: input, shape index: {}]
  %s3 = inlined_call_operand.vmem [shape: f32[250,128], index: 3, kind: output, shape index: {}]
  %s4 = sld [smem:[#allocation0]]
  $region45: #{gat_layer_forward.1} parent=0
    _
  %s6 = ssub.s32 1, %s4
  %s7 = scalar_select 0, %s6, %s4
  loop: start=0, step=1, limit=4
  $region2: #{gat_layer_forward.1} parent=0 // loop_pre_header
    _
  $region3: #{gat_layer_forward.1} parent=0 // loop_header
    %s9 = sphi 0, %s13
    %p10 = scmp.ge.s32.totalorder %s9, 4
    %s19 = sphi 0, %s21
    %s22 = sphi 0, %s19
    %s23 = sphi 0, %s22
    %s39 = sphi 0, %s23
    %s43 = sphi 0, %s43
    %s45 = sphi 0, %s43
    %s46 = sphi 0, %s45
    %s60 = sphi 0, %s46
    %s64 = sphi 0, %s64
    %s66 = sphi 0, %s64
    %s67 = sphi 0, %s66
    %s81 = sphi 0, %s67
    %s87 = sphi 0, %s89
    %s90 = sphi 0, %s87
    %s91 = sphi 0, %s90
    %s107 = sphi 0, %s91
  $region4: #{gat_layer_forward.1} parent=0 // loop_header_branch
    %12 = sbr.rel (%p10) target = $region8
  $region5: #{gat_layer_forward.1} parent=0 // loop_body
    %s14 = ssub.s32 %s9, 1
    %s15 = ssub.s32 %s9, 2
    %s16 = sadd.s32 %s9, 1
    %s17 = ssub.s32 %s9, %s16
    %p18 = scmp.eq.s32.totalorder %s17, 0
    %s20 = sadd.s32 %s19, 1
    %s21 = scalar_select %p18, %s19, %s20
    %p24 = pneg %p18
    %p25 = scmp.eq.s32.totalorder %s9, 1
    %p26 = por %p24, %p25
    %p27 = scmp.ne.s32.totalorder %s19, %s22
    %p28 = scmp.eq.s32.totalorder %s9, 0
    %p29 = por %p27, %p28
    %p30 = scmp.ne.s32.totalorder %s19, %s22
    %p31 = scmp.eq.s32.totalorder %s14, 1
    %p32 = por %p30, %p31
    %p33 = scmp.ne.s32.totalorder %s22, %s23
    %p34 = scmp.eq.s32.totalorder %s14, 0
    %p35 = por %p33, %p34
    %p36 = scmp.ne.s32.totalorder %s22, %s23
    %p37 = scmp.eq.s32.totalorder %s15, 1
    %p38 = por %p36, %p37
    %p40 = scmp.ne.s32.totalorder %s23, %s39
    %p41 = scmp.eq.s32.totalorder %s15, 0
    %p42 = por %p40, %p41
    %s44 = sadd.s32 %s43, 1
    %p47 = scmp.eq.s32.totalorder %s9, 1
    %p48 = scmp.ne.s32.totalorder %s43, %s45
    %p49 = scmp.eq.s32.totalorder %s9, 0
    %p50 = por %p48, %p49
    %p51 = scmp.ne.s32.totalorder %s43, %s45
    %p52 = scmp.eq.s32.totalorder %s14, 1
    %p53 = por %p51, %p52
    %p54 = scmp.ne.s32.totalorder %s45, %s46
    %p55 = scmp.eq.s32.totalorder %s14, 0
    %p56 = por %p54, %p55
    %p57 = scmp.ne.s32.totalorder %s45, %s46
    %p58 = scmp.eq.s32.totalorder %s15, 1
    %p59 = por %p57, %p58
    %p61 = scmp.ne.s32.totalorder %s46, %s60
    %p62 = scmp.eq.s32.totalorder %s15, 0
    %p63 = por %p61, %p62
    %s65 = sadd.s32 %s64, 1
    %p68 = scmp.eq.s32.totalorder %s9, 1
    %p69 = scmp.ne.s32.totalorder %s64, %s66
    %p70 = scmp.eq.s32.totalorder %s9, 0
    %p71 = por %p69, %p70
    %p72 = scmp.ne.s32.totalorder %s64, %s66
    %p73 = scmp.eq.s32.totalorder %s14, 1
    %p74 = por %p72, %p73
    %p75 = scmp.ne.s32.totalorder %s66, %s67
    %p76 = scmp.eq.s32.totalorder %s14, 0
    %p77 = por %p75, %p76
    %p78 = scmp.ne.s32.totalorder %s66, %s67
    %p79 = scmp.eq.s32.totalorder %s15, 1
    %p80 = por %p78, %p79
    %p82 = scmp.ne.s32.totalorder %s67, %s81
    %p83 = scmp.eq.s32.totalorder %s15, 0
    %p84 = por %p82, %p83
    %s85 = ssub.s32 %s9, %s16
    %p86 = scmp.eq.s32.totalorder %s85, 0
    %s88 = sadd.s32 %s87, 1
    %s89 = scalar_select %p86, %s87, %s88
    %p92 = pneg %p86
    %p93 = scmp.eq.s32.totalorder %s9, 1
    %p94 = por %p92, %p93
    %p95 = scmp.ne.s32.totalorder %s87, %s90
    %p96 = scmp.eq.s32.totalorder %s9, 0
    %p97 = por %p95, %p96
    %p98 = scmp.ne.s32.totalorder %s87, %s90
    %p99 = scmp.eq.s32.totalorder %s14, 1
    %p100 = por %p98, %p99
    %p101 = scmp.ne.s32.totalorder %s90, %s91
    %p102 = scmp.eq.s32.totalorder %s14, 0
    %p103 = por %p101, %p102
    %p104 = scmp.ne.s32.totalorder %s90, %s91
    %p105 = scmp.eq.s32.totalorder %s15, 1
    %p106 = por %p104, %p105
    %p108 = scmp.ne.s32.totalorder %s91, %s107
    %p109 = scmp.eq.s32.totalorder %s15, 0
    %p110 = por %p108, %p109
    %p111 = scmp.le.s32.totalorder 1, %s9
    %p112 = scmp.lt.s32.totalorder %s9, 3
    %p113 = pnand %p111, %p112
    %p114 = pneg %p113
    // Predicated region
    $region9: #{gat_layer_forward.1} parent=5 // pred_check
      _
    $region10: #{gat_layer_forward.1} parent=5 // pred_check_branch
      %116 = sbr.rel (%p113) target = $region12
    $region11: #{gat_layer_forward.1} parent=5 // pred_region
      %s117 = ssub.s32 %s9, 1
      // Predicated region
      $region13: #{gat_layer_forward.1} parent=11 // pred_check
        %p118 = pneg %p56
      $region14: #{gat_layer_forward.1} parent=11 // pred_check_branch
        %120 = sbr.rel (%p118) target = $region16
      $region15: #{gat_layer_forward.1} parent=11 // pred_region
        _
      $region16: #{gat_layer_forward.1} parent=11 // pred_fallthru
        _
      // Predicated region
      $region17: #{gat_layer_forward.1} parent=11 // pred_check
        %p121 = pneg %p77
      $region18: #{gat_layer_forward.1} parent=11 // pred_check_branch
        %123 = sbr.rel (%p121) target = $region20
      $region19: #{gat_layer_forward.1} parent=11 // pred_region
        _
      $region20: #{gat_layer_forward.1} parent=11 // pred_fallthru
        _
    $region12: #{gat_layer_forward.1} parent=5 // pred_fallthru
      _
    %p124 = scmp.lt.s32.totalorder %s9, 2
    // Predicated region
    $region21: #{gat_layer_forward.1} parent=5 // pred_check
      %p125 = pneg %p124
    $region22: #{gat_layer_forward.1} parent=5 // pred_check_branch
      %127 = sbr.rel (%p125) target = $region24
    $region23: #{gat_layer_forward.1} parent=5 // pred_region
      // Predicated region
      $region25: #{gat_layer_forward.1} parent=23 // pred_check
        %p128 = pneg %p29
      $region26: #{gat_layer_forward.1} parent=23 // pred_check_branch
        %130 = sbr.rel (%p128) target = $region28
      $region27: #{gat_layer_forward.1} parent=23 // pred_region
        %s131 = smul.u32 16, %s9
        %p132 = scmp.lt.s32.totalorder %s131, 31
        %s133 = scalar_select %p132, %s131, 31
        %s134 = smul.addr %s133, 8
        %s135 = scalar_lea.vmem %s0, %s134
        %s136 = smul.u32 16, %s9
      $region28: #{gat_layer_forward.1} parent=23 // pred_fallthru
        _
    $region24: #{gat_layer_forward.1} parent=5 // pred_fallthru
      _
    %p137 = scmp.le.s32.totalorder 1, %s9
    %p138 = scmp.lt.s32.totalorder %s9, 3
    %p139 = pnand %p137, %p138
    %p140 = pneg %p139
    // Predicated region
    $region29: #{gat_layer_forward.1} parent=5 // pred_check
      _
    $region30: #{gat_layer_forward.1} parent=5 // pred_check_branch
      %142 = sbr.rel (%p139) target = $region32
    $region31: #{gat_layer_forward.1} parent=5 // pred_region
      %s143 = ssub.s32 %s9, 1
      %s144 = smul.u32 16, %s14
      %p145 = scmp.lt.s32.totalorder %s144, 31
      %s146 = scalar_select %p145, %s144, 31
      %s147 = smul.addr %s146, 8
      %s148 = scalar_lea.vmem %s0, %s147
      %p149 = pneg %p35
      %p150 = pneg %p32
      %p151 = pneg %p56
      %p152 = pneg %p53
      %p153 = pneg %p77
      %p154 = pneg %p74
      %p155 = pneg %p103
      %p156 = pneg %p100
      %s157 = smul.u32 16, %s14
      %p158 = scmp.lt.s32.totalorder %s157, 31
      %s159 = scalar_select %p158, %s157, 31
      %s160 = smul.addr %s159, 8
      %s161 = scalar_lea.vmem %s3, %s160
      %s162 = smul.u32 16, %s14
      %p163 = scmp.lt.s32.totalorder %s162, 31
      %s164 = scalar_select %p163, %s162, 31
      %s165 = smul.addr %s164, 8
      %s166 = scalar_lea.vmem %s0, %s165
      %s167 = smul.u32 16, %s14
      %s168 = smul.u32 16, %s14
      %p169 = scmp.lt.s32.totalorder %s168, 31
      %s170 = scalar_select %p169, %s168, 31
      %s171 = smul.addr %s170, 8
      %s172 = scalar_lea.vmem %s3, %s171
      %s173 = smul.u32 16, %s14
      %v174 = vld [vmem:[%s166] sm:$0xff]
      %v175 = vld [vmem:[%s166 + $0x8] sm:$0xff]
      %v176 = vld [vmem:[%s166 + $0x10] sm:$0xff]
      %v177 = vld [vmem:[%s166 + $0x18] sm:$0xff]
      %v178 = vld [vmem:[%s166 + $0x20] sm:$0xff]
      %v179 = vld [vmem:[%s166 + $0x28] sm:$0xff]
      %v180 = vld [vmem:[%s166 + $0x30] sm:$0xff]
      %v181 = vld [vmem:[%s166 + $0x38] sm:$0xff]
      %v182 = vld [vmem:[%s166 + $0x40] sm:$0xff]
      %v183 = vld [vmem:[%s166 + $0x48] sm:$0xff]
      %v184 = vld [vmem:[%s166 + $0x50] sm:$0xff]
      %v185 = vld [vmem:[%s166 + $0x58] sm:$0xff]
      %v186 = vld [vmem:[%s166 + $0x60] sm:$0xff]
      %v187 = vld [vmem:[%s166 + $0x68] sm:$0xff]
      %v188 = vld [vmem:[%s166 + $0x70] sm:$0xff]
      %v189 = vld [vmem:[%s166 + $0x78] sm:$0xff]
      %v190 = vmul.f32 %v174, %v174
      %v191 = vmul.f32 %v175, %v175
      %v192 = vmul.f32 %v176, %v176
      %v193 = vmul.f32 %v177, %v177
      %v194 = vmul.f32 %v178, %v178
      %v195 = vmul.f32 %v179, %v179
      %v196 = vmul.f32 %v180, %v180
      %v197 = vmul.f32 %v181, %v181
      %v198 = vmul.f32 %v182, %v182
      %v199 = vmul.f32 %v183, %v183
      %v200 = vmul.f32 %v184, %v184
      %v201 = vmul.f32 %v185, %v185
      %v202 = vmul.f32 %v186, %v186
      %v203 = vmul.f32 %v187, %v187
      %v204 = vmul.f32 %v188, %v188
      %v205 = vmul.f32 %v189, %v189
      %v206 = vld [vmem:[%s1] sm:$0xff]
      %v207 = vld [vmem:[%s1 + $0x8] sm:$0xff]
      %v208 = vld [vmem:[%s1 + $0x10] sm:$0xff]
      %v209 = vld [vmem:[%s1 + $0x18] sm:$0xff]
      %v210 = vld [vmem:[%s1 + $0x20] sm:$0xff]
      %v211 = vld [vmem:[%s1 + $0x28] sm:$0xff]
      %v212 = vld [vmem:[%s1 + $0x30] sm:$0xff]
      %v213 = vld [vmem:[%s1 + $0x38] sm:$0xff]
      %v214 = vld [vmem:[%s1 + $0x40] sm:$0xff]
      %v215 = vld [vmem:[%s1 + $0x48] sm:$0xff]
      %v216 = vld [vmem:[%s1 + $0x50] sm:$0xff]
      %v217 = vld [vmem:[%s1 + $0x58] sm:$0xff]
      %v218 = vld [vmem:[%s1 + $0x60] sm:$0xff]
      %v219 = vld [vmem:[%s1 + $0x68] sm:$0xff]
      %v220 = vld [vmem:[%s1 + $0x70] sm:$0xff]
      %v221 = vld [vmem:[%s1 + $0x78] sm:$0xff]
      %222 = vmatpush.msra.mxu0 %v221
      %223 = vmatpush.msra.mxu0 %v220
      %224 = vmatpush.msra.mxu0 %v219
      %225 = vmatpush.msra.mxu0 %v218
      %226 = vmatpush.msra.mxu0 %v217
      %227 = vmatpush.msra.mxu0 %v216
      %228 = vmatpush.msra.mxu0 %v215
      %229 = vmatpush.msra.mxu0 %v214
      %230 = vmatpush.msra.mxu0 %v213
      %231 = vmatpush.msra.mxu0 %v212
      %232 = vmatpush.msra.mxu0 %v211
      %233 = vmatpush.msra.mxu0 %v210
      %234 = vmatpush.msra.mxu0 %v209
      %235 = vmatpush.msra.mxu0 %v208
      %236 = vmatpush.msra.mxu0 %v207
      %237 = vmatpush.msra.mxu0 %v206
      %238 = vmatmul.f32.gmra.mxu0 %v190
      %v239 = vpop.f32.mrf.mxu0
      %v240 = vadd.f32 0.0, %v239
      %241 = vmatmul.f32.gmra.mxu0 %v191
      %v242 = vpop.f32.mrf.mxu0
      %v243 = vadd.f32 0.0, %v242
      %244 = vmatmul.f32.gmra.mxu0 %v192
      %v245 = vpop.f32.mrf.mxu0
      %v246 = vadd.f32 0.0, %v245
      %247 = vmatmul.f32.gmra.mxu0 %v193
      %v248 = vpop.f32.mrf.mxu0
      %v249 = vadd.f32 0.0, %v248
      %250 = vmatmul.f32.gmra.mxu0 %v194
      %v251 = vpop.f32.mrf.mxu0
      %v252 = vadd.f32 0.0, %v251
      %253 = vmatmul.f32.gmra.mxu0 %v195
      %v254 = vpop.f32.mrf.mxu0
      %v255 = vadd.f32 0.0, %v254
      %256 = vmatmul.f32.gmra.mxu0 %v196
      %v257 = vpop.f32.mrf.mxu0
      %v258 = vadd.f32 0.0, %v257
      %259 = vmatmul.f32.gmra.mxu0 %v197
      %v260 = vpop.f32.mrf.mxu0
      %v261 = vadd.f32 0.0, %v260
      %262 = vmatmul.f32.gmra.mxu0 %v198
      %v263 = vpop.f32.mrf.mxu0
      %v264 = vadd.f32 0.0, %v263
      %265 = vmatmul.f32.gmra.mxu0 %v199
      %v266 = vpop.f32.mrf.mxu0
      %v267 = vadd.f32 0.0, %v266
      %268 = vmatmul.f32.gmra.mxu0 %v200
      %v269 = vpop.f32.mrf.mxu0
      %v270 = vadd.f32 0.0, %v269
      %271 = vmatmul.f32.gmra.mxu0 %v201
      %v272 = vpop.f32.mrf.mxu0
      %v273 = vadd.f32 0.0, %v272
      %274 = vmatmul.f32.gmra.mxu0 %v202
      %v275 = vpop.f32.mrf.mxu0
      %v276 = vadd.f32 0.0, %v275
      %277 = vmatmul.f32.gmra.mxu0 %v203
      %v278 = vpop.f32.mrf.mxu0
      %v279 = vadd.f32 0.0, %v278
      %280 = vmatmul.f32.gmra.mxu0 %v204
      %v281 = vpop.f32.mrf.mxu0
      %v282 = vadd.f32 0.0, %v281
      %283 = vmatmul.f32.gmra.mxu0 %v205
      %v284 = vpop.f32.mrf.mxu0
      %v285 = vadd.f32 0.0, %v284
      %286 = vdwg.mxu0
      %v287 = vmul.f32 %v240, 0.03125
      %v288 = vmul.f32 %v243, 0.03125
      %v289 = vmul.f32 %v246, 0.03125
      %v290 = vmul.f32 %v249, 0.03125
      %v291 = vmul.f32 %v252, 0.03125
      %v292 = vmul.f32 %v255, 0.03125
      %v293 = vmul.f32 %v258, 0.03125
      %v294 = vmul.f32 %v261, 0.03125
      %v295 = vmul.f32 %v264, 0.03125
      %v296 = vmul.f32 %v267, 0.03125
      %v297 = vmul.f32 %v270, 0.03125
      %v298 = vmul.f32 %v273, 0.03125
      %v299 = vmul.f32 %v276, 0.03125
      %v300 = vmul.f32 %v279, 0.03125
      %v301 = vmul.f32 %v282, 0.03125
      %v302 = vmul.f32 %v285, 0.03125
      %v303 = vadd.f32 %v287, 1e-06
      %v304 = vadd.f32 %v288, 1e-06
      %v305 = vadd.f32 %v289, 1e-06
      %v306 = vadd.f32 %v290, 1e-06
      %v307 = vadd.f32 %v291, 1e-06
      %v308 = vadd.f32 %v292, 1e-06
      %v309 = vadd.f32 %v293, 1e-06
      %v310 = vadd.f32 %v294, 1e-06
      %v311 = vadd.f32 %v295, 1e-06
      %v312 = vadd.f32 %v296, 1e-06
      %v313 = vadd.f32 %v297, 1e-06
      %v314 = vadd.f32 %v298, 1e-06
      %v315 = vadd.f32 %v299, 1e-06
      %v316 = vadd.f32 %v300, 1e-06
      %v317 = vadd.f32 %v301, 1e-06
      %v318 = vadd.f32 %v302, 1e-06
      %v319 = vrsqrt.pop %v303
      %v320 = vmul.f32 %v319, %v303
      %v321 = vmul.f32 %v320, %v319
      %v322 = vmul.f32 0.5, %v321
      %v323 = vsub.f32 1.5, %v322
      %v324 = vmul.f32 %v319, %v323
      %vm325 = vweird.f32 %v303
      %vm326 = vweird.f32 %v319
      %vm327 = vmor %vm325, %vm326
      %v328 = vsel %vm327, %v319, %v324
      %v329 = vrsqrt.pop %v304
      %v330 = vmul.f32 %v329, %v304
      %v331 = vmul.f32 %v330, %v329
      %v332 = vmul.f32 0.5, %v331
      %v333 = vsub.f32 1.5, %v332
      %v334 = vmul.f32 %v329, %v333
      %vm335 = vweird.f32 %v304
      %vm336 = vweird.f32 %v329
      %vm337 = vmor %vm335, %vm336
      %v338 = vsel %vm337, %v329, %v334
      %v339 = vrsqrt.pop %v305
      %v340 = vmul.f32 %v339, %v305
      %v341 = vmul.f32 %v340, %v339
      %v342 = vmul.f32 0.5, %v341
      %v343 = vsub.f32 1.5, %v342
      %v344 = vmul.f32 %v339, %v343
      %vm345 = vweird.f32 %v305
      %vm346 = vweird.f32 %v339
      %vm347 = vmor %vm345, %vm346
      %v348 = vsel %vm347, %v339, %v344
      %v349 = vrsqrt.pop %v306
      %v350 = vmul.f32 %v349, %v306
      %v351 = vmul.f32 %v350, %v349
      %v352 = vmul.f32 0.5, %v351
      %v353 = vsub.f32 1.5, %v352
      %v354 = vmul.f32 %v349, %v353
      %vm355 = vweird.f32 %v306
      %vm356 = vweird.f32 %v349
      %vm357 = vmor %vm355, %vm356
      %v358 = vsel %vm357, %v349, %v354
      %v359 = vrsqrt.pop %v307
      %v360 = vmul.f32 %v359, %v307
      %v361 = vmul.f32 %v360, %v359
      %v362 = vmul.f32 0.5, %v361
      %v363 = vsub.f32 1.5, %v362
      %v364 = vmul.f32 %v359, %v363
      %vm365 = vweird.f32 %v307
      %vm366 = vweird.f32 %v359
      %vm367 = vmor %vm365, %vm366
      %v368 = vsel %vm367, %v359, %v364
      %v369 = vrsqrt.pop %v308
      %v370 = vmul.f32 %v369, %v308
      %v371 = vmul.f32 %v370, %v369
      %v372 = vmul.f32 0.5, %v371
      %v373 = vsub.f32 1.5, %v372
      %v374 = vmul.f32 %v369, %v373
      %vm375 = vweird.f32 %v308
      %vm376 = vweird.f32 %v369
      %vm377 = vmor %vm375, %vm376
      %v378 = vsel %vm377, %v369, %v374
      %v379 = vrsqrt.pop %v309
      %v380 = vmul.f32 %v379, %v309
      %v381 = vmul.f32 %v380, %v379
      %v382 = vmul.f32 0.5, %v381
      %v383 = vsub.f32 1.5, %v382
      %v384 = vmul.f32 %v379, %v383
      %vm385 = vweird.f32 %v309
      %vm386 = vweird.f32 %v379
      %vm387 = vmor %vm385, %vm386
      %v388 = vsel %vm387, %v379, %v384
      %v389 = vrsqrt.pop %v310
      %v390 = vmul.f32 %v389, %v310
      %v391 = vmul.f32 %v390, %v389
      %v392 = vmul.f32 0.5, %v391
      %v393 = vsub.f32 1.5, %v392
      %v394 = vmul.f32 %v389, %v393
      %vm395 = vweird.f32 %v310
      %vm396 = vweird.f32 %v389
      %vm397 = vmor %vm395, %vm396
      %v398 = vsel %vm397, %v389, %v394
      %v399 = vrsqrt.pop %v311
      %v400 = vmul.f32 %v399, %v311
      %v401 = vmul.f32 %v400, %v399
      %v402 = vmul.f32 0.5, %v401
      %v403 = vsub.f32 1.5, %v402
      %v404 = vmul.f32 %v399, %v403
      %vm405 = vweird.f32 %v311
      %vm406 = vweird.f32 %v399
      %vm407 = vmor %vm405, %vm406
      %v408 = vsel %vm407, %v399, %v404
      %v409 = vrsqrt.pop %v312
      %v410 = vmul.f32 %v409, %v312
      %v411 = vmul.f32 %v410, %v409
      %v412 = vmul.f32 0.5, %v411
      %v413 = vsub.f32 1.5, %v412
      %v414 = vmul.f32 %v409, %v413
      %vm415 = vweird.f32 %v312
      %vm416 = vweird.f32 %v409
      %vm417 = vmor %vm415, %vm416
      %v418 = vsel %vm417, %v409, %v414
      %v419 = vrsqrt.pop %v313
      %v420 = vmul.f32 %v419, %v313
      %v421 = vmul.f32 %v420, %v419
      %v422 = vmul.f32 0.5, %v421
      %v423 = vsub.f32 1.5, %v422
      %v424 = vmul.f32 %v419, %v423
      %vm425 = vweird.f32 %v313
      %vm426 = vweird.f32 %v419
      %vm427 = vmor %vm425, %vm426
      %v428 = vsel %vm427, %v419, %v424
      %v429 = vrsqrt.pop %v314
      %v430 = vmul.f32 %v429, %v314
      %v431 = vmul.f32 %v430, %v429
      %v432 = vmul.f32 0.5, %v431
      %v433 = vsub.f32 1.5, %v432
      %v434 = vmul.f32 %v429, %v433
      %vm435 = vweird.f32 %v314
      %vm436 = vweird.f32 %v429
      %vm437 = vmor %vm435, %vm436
      %v438 = vsel %vm437, %v429, %v434
      %v439 = vrsqrt.pop %v315
      %v440 = vmul.f32 %v439, %v315
      %v441 = vmul.f32 %v440, %v439
      %v442 = vmul.f32 0.5, %v441
      %v443 = vsub.f32 1.5, %v442
      %v444 = vmul.f32 %v439, %v443
      %vm445 = vweird.f32 %v315
      %vm446 = vweird.f32 %v439
      %vm447 = vmor %vm445, %vm446
      %v448 = vsel %vm447, %v439, %v444
      %v449 = vrsqrt.pop %v316
      %v450 = vmul.f32 %v449, %v316
      %v451 = vmul.f32 %v450, %v449
      %v452 = vmul.f32 0.5, %v451
      %v453 = vsub.f32 1.5, %v452
      %v454 = vmul.f32 %v449, %v453
      %vm455 = vweird.f32 %v316
      %vm456 = vweird.f32 %v449
      %vm457 = vmor %vm455, %vm456
      %v458 = vsel %vm457, %v449, %v454
      %v459 = vrsqrt.pop %v317
      %v460 = vmul.f32 %v459, %v317
      %v461 = vmul.f32 %v460, %v459
      %v462 = vmul.f32 0.5, %v461
      %v463 = vsub.f32 1.5, %v462
      %v464 = vmul.f32 %v459, %v463
      %vm465 = vweird.f32 %v317
      %vm466 = vweird.f32 %v459
      %vm467 = vmor %vm465, %vm466
      %v468 = vsel %vm467, %v459, %v464
      %v469 = vrsqrt.pop %v318
      %v470 = vmul.f32 %v469, %v318
      %v471 = vmul.f32 %v470, %v469
      %v472 = vmul.f32 0.5, %v471
      %v473 = vsub.f32 1.5, %v472
      %v474 = vmul.f32 %v469, %v473
      %vm475 = vweird.f32 %v318
      %vm476 = vweird.f32 %v469
      %vm477 = vmor %vm475, %vm476
      %v478 = vsel %vm477, %v469, %v474
      %v479 = vmul.f32 %v174, %v328
      %v480 = vmul.f32 %v175, %v338
      %v481 = vmul.f32 %v176, %v348
      %v482 = vmul.f32 %v177, %v358
      %v483 = vmul.f32 %v178, %v368
      %v484 = vmul.f32 %v179, %v378
      %v485 = vmul.f32 %v180, %v388
      %v486 = vmul.f32 %v181, %v398
      %v487 = vmul.f32 %v182, %v408
      %v488 = vmul.f32 %v183, %v418
      %v489 = vmul.f32 %v184, %v428
      %v490 = vmul.f32 %v185, %v438
      %v491 = vmul.f32 %v186, %v448
      %v492 = vmul.f32 %v187, %v458
      %v493 = vmul.f32 %v188, %v468
      %v494 = vmul.f32 %v189, %v478
      %v495 = vld [vmem:[%s2] sm:$0xff]
      %v496 = vld [vmem:[%s2 + $0x8] sm:$0xff]
      %v497 = vld [vmem:[%s2 + $0x10] sm:$0xff]
      %v498 = vld [vmem:[%s2 + $0x18] sm:$0xff]
      %v499 = vld [vmem:[%s2 + $0x20] sm:$0xff]
      %v500 = vld [vmem:[%s2 + $0x28] sm:$0xff]
      %v501 = vld [vmem:[%s2 + $0x30] sm:$0xff]
      %v502 = vld [vmem:[%s2 + $0x38] sm:$0xff]
      %v503 = vld [vmem:[%s2 + $0x40] sm:$0xff]
      %v504 = vld [vmem:[%s2 + $0x48] sm:$0xff]
      %v505 = vld [vmem:[%s2 + $0x50] sm:$0xff]
      %v506 = vld [vmem:[%s2 + $0x58] sm:$0xff]
      %v507 = vld [vmem:[%s2 + $0x60] sm:$0xff]
      %v508 = vld [vmem:[%s2 + $0x68] sm:$0xff]
      %v509 = vld [vmem:[%s2 + $0x70] sm:$0xff]
      %v510 = vld [vmem:[%s2 + $0x78] sm:$0xff]
      %511 = vmatpush.msra.mxu0 %v510
      %512 = vmatpush.msra.mxu0 %v509
      %513 = vmatpush.msra.mxu0 %v508
      %514 = vmatpush.msra.mxu0 %v507
      %515 = vmatpush.msra.mxu0 %v506
      %516 = vmatpush.msra.mxu0 %v505
      %517 = vmatpush.msra.mxu0 %v504
      %518 = vmatpush.msra.mxu0 %v503
      %519 = vmatpush.msra.mxu0 %v502
      %520 = vmatpush.msra.mxu0 %v501
      %521 = vmatpush.msra.mxu0 %v500
      %522 = vmatpush.msra.mxu0 %v499
      %523 = vmatpush.msra.mxu0 %v498
      %524 = vmatpush.msra.mxu0 %v497
      %525 = vmatpush.msra.mxu0 %v496
      %526 = vmatpush.msra.mxu0 %v495
      %527 = vmatmul.f32.gmra.mxu0 %v479
      %v528 = vpop.f32.mrf.mxu0
      %v529 = vadd.f32 0.0, %v528
      %530 = vmatmul.f32.gmra.mxu0 %v480
      %v531 = vpop.f32.mrf.mxu0
      %v532 = vadd.f32 0.0, %v531
      %533 = vmatmul.f32.gmra.mxu0 %v481
      %v534 = vpop.f32.mrf.mxu0
      %v535 = vadd.f32 0.0, %v534
      %536 = vmatmul.f32.gmra.mxu0 %v482
      %v537 = vpop.f32.mrf.mxu0
      %v538 = vadd.f32 0.0, %v537
      %539 = vmatmul.f32.gmra.mxu0 %v483
      %v540 = vpop.f32.mrf.mxu0
      %v541 = vadd.f32 0.0, %v540
      %542 = vmatmul.f32.gmra.mxu0 %v484
      %v543 = vpop.f32.mrf.mxu0
      %v544 = vadd.f32 0.0, %v543
      %545 = vmatmul.f32.gmra.mxu0 %v485
      %v546 = vpop.f32.mrf.mxu0
      %v547 = vadd.f32 0.0, %v546
      %548 = vmatmul.f32.gmra.mxu0 %v486
      %v549 = vpop.f32.mrf.mxu0
      %v550 = vadd.f32 0.0, %v549
      %551 = vmatmul.f32.gmra.mxu0 %v487
      %v552 = vpop.f32.mrf.mxu0
      %v553 = vadd.f32 0.0, %v552
      %554 = vmatmul.f32.gmra.mxu0 %v488
      %v555 = vpop.f32.mrf.mxu0
      %v556 = vadd.f32 0.0, %v555
      %557 = vmatmul.f32.gmra.mxu0 %v489
      %v558 = vpop.f32.mrf.mxu0
      %v559 = vadd.f32 0.0, %v558
      %560 = vmatmul.f32.gmra.mxu0 %v490
      %v561 = vpop.f32.mrf.mxu0
      %v562 = vadd.f32 0.0, %v561
      %563 = vmatmul.f32.gmra.mxu0 %v491
      %v564 = vpop.f32.mrf.mxu0
      %v565 = vadd.f32 0.0, %v564
      %566 = vmatmul.f32.gmra.mxu0 %v492
      %v567 = vpop.f32.mrf.mxu0
      %v568 = vadd.f32 0.0, %v567
      %569 = vmatmul.f32.gmra.mxu0 %v493
      %v570 = vpop.f32.mrf.mxu0
      %v571 = vadd.f32 0.0, %v570
      %572 = vmatmul.f32.gmra.mxu0 %v494
      %v573 = vpop.f32.mrf.mxu0
      %v574 = vadd.f32 0.0, %v573
      %575 = vdwg.mxu0
      %v576 = vadd.f32 %v174, %v529
      %v577 = vadd.f32 %v175, %v532
      %v578 = vadd.f32 %v176, %v535
      %v579 = vadd.f32 %v177, %v538
      %v580 = vadd.f32 %v178, %v541
      %v581 = vadd.f32 %v179, %v544
      %v582 = vadd.f32 %v180, %v547
      %v583 = vadd.f32 %v181, %v550
      %v584 = vadd.f32 %v182, %v553
      %v585 = vadd.f32 %v183, %v556
      %v586 = vadd.f32 %v184, %v559
      %v587 = vadd.f32 %v185, %v562
      %v588 = vadd.f32 %v186, %v565
      %v589 = vadd.f32 %v187, %v568
      %v590 = vadd.f32 %v188, %v571
      %v591 = vadd.f32 %v189, %v574
      %592 = vst [vmem:[%s172] sm:$0xff] %v576
      %593 = vst [vmem:[%s172 + $0x8] sm:$0xff] %v577
      %594 = vst [vmem:[%s172 + $0x10] sm:$0xff] %v578
      %595 = vst [vmem:[%s172 + $0x18] sm:$0xff] %v579
      %596 = vst [vmem:[%s172 + $0x20] sm:$0xff] %v580
      %597 = vst [vmem:[%s172 + $0x28] sm:$0xff] %v581
      %598 = vst [vmem:[%s172 + $0x30] sm:$0xff] %v582
      %599 = vst [vmem:[%s172 + $0x38] sm:$0xff] %v583
      %600 = vst [vmem:[%s172 + $0x40] sm:$0xff] %v584
      %601 = vst [vmem:[%s172 + $0x48] sm:$0xff] %v585
      %602 = vst [vmem:[%s172 + $0x50] sm:$0xff] %v586
      %603 = vst [vmem:[%s172 + $0x58] sm:$0xff] %v587
      %604 = vst [vmem:[%s172 + $0x60] sm:$0xff] %v588
      %605 = vst [vmem:[%s172 + $0x68] sm:$0xff] %v589
      %606 = vst [vmem:[%s172 + $0x70] sm:$0xff] %v590
      %607 = vst [vmem:[%s172 + $0x78] sm:$0xff] %v591
      %s608 = smul.u32 16, %s14
      %p609 = scmp.lt.s32.totalorder %s608, 31
      %s610 = scalar_select %p609, %s608, 31
      %s611 = smul.addr %s610, 8
      %s612 = scalar_lea.vmem %s3, %s611
      // Predicated region
      $region33: #{gat_layer_forward.1} parent=31 // pred_check
        %p613 = pneg %p100
      $region34: #{gat_layer_forward.1} parent=31 // pred_check_branch
        %615 = sbr.rel (%p613) target = $region36
      $region35: #{gat_layer_forward.1} parent=31 // pred_region
        %s616 = smul.u32 16, %s14
      $region36: #{gat_layer_forward.1} parent=31 // pred_fallthru
        _
    $region32: #{gat_layer_forward.1} parent=5 // pred_fallthru
      _
    %p617 = scmp.le.s32.totalorder 2, %s9
    // Predicated region
    $region37: #{gat_layer_forward.1} parent=5 // pred_check
      %p618 = pneg %p617
    $region38: #{gat_layer_forward.1} parent=5 // pred_check_branch
      %620 = sbr.rel (%p618) target = $region40
    $region39: #{gat_layer_forward.1} parent=5 // pred_region
      %s621 = ssub.s32 %s9, 2
      // Predicated region
      $region41: #{gat_layer_forward.1} parent=39 // pred_check
        %p622 = pneg %p106
      $region42: #{gat_layer_forward.1} parent=39 // pred_check_branch
        %624 = sbr.rel (%p622) target = $region44
      $region43: #{gat_layer_forward.1} parent=39 // pred_region
        %s625 = smul.u32 16, %s15
        %p626 = scmp.lt.s32.totalorder %s625, 31
        %s627 = scalar_select %p626, %s625, 31
        %s628 = smul.addr %s627, 8
        %s629 = scalar_lea.vmem %s3, %s628
      $region44: #{gat_layer_forward.1} parent=39 // pred_fallthru
        _
    $region40: #{gat_layer_forward.1} parent=5 // pred_fallthru
      _
  $region6: #{gat_layer_forward.1} parent=0 // loop_footer
    %s13 = sadd.s32 1, %s9
  $region7: #{gat_layer_forward.1} parent=0 // loop_footer_branch
    %8 = sbr.rel target = $region3
  $region8: #{gat_layer_forward.1} parent=0 // loop_exit
    _

</llo_original>
